<compile_context>
chip_gen: v7x
topology: tpu7x:2x2x1
jax: 0.10.0
libtpu: 0.0.40
codegen_flags: <defaults>
</compile_context>

<pallas_src>
import functools

import jax
import jax.numpy as jnp
from jax.experimental import pallas as pl
from jax.experimental.pallas import tpu as pltpu


_EPS = 1e-5           # nn.LayerNorm default eps
_NEG_SLOPE = 0.01     # F.leaky_relu default negative_slope
_LANE = 128           # TPU lane width


def _round_up(v, m):
    return (v + m - 1) // m * m


def _pad2d(x, rows, cols):
    r, c = x.shape
    return jnp.pad(x, ((0, rows - r), (0, cols - c)))


def _lane_mask(f_pad, f_true):
    return jax.lax.broadcasted_iota(jnp.int32, (1, f_pad), 1) < f_true


def _masked_layernorm(h, gamma, beta, mask, n_true):
    # Single reduction pass: biased var = E[h^2] - mu^2 (matches PyTorch LN).
    hm = jnp.where(mask, h, 0.0)
    inv_n = 1.0 / n_true
    mu = jnp.sum(hm, axis=-1, keepdims=True) * inv_n
    ms = jnp.sum(hm * hm, axis=-1, keepdims=True) * inv_n
    var = jnp.maximum(ms - mu * mu, 0.0)
    return (h - mu) * jax.lax.rsqrt(var + _EPS) * gamma + beta


def _leaky_relu(h):
    return jnp.where(h >= 0, h, _NEG_SLOPE * h)


# ---------------- stage 0: S1 = x @ W1 (row-tiled dense matmul) --------------
def _xw_kernel(x_ref, w_ref, s_ref):
    s = jnp.dot(x_ref[...], w_ref[...], preferred_element_type=jnp.float32)
    s_ref[...] = s.astype(s_ref.dtype)


# -------- stage 1: S2 = LeakyReLU(LN(A1_tile @ S1 + b1)) @ W2 ----------------
def _gcn_mid_kernel(a_ref, s_ref, p_ref, w2_ref, s2_ref, *, f_true):
    f_pad = p_ref.shape[-1]
    mask = _lane_mask(f_pad, f_true)
    h = jnp.dot(a_ref[...], s_ref[...], preferred_element_type=jnp.float32)
    h = h + p_ref[0:1, :]
    h = _masked_layernorm(h, p_ref[1:2, :], p_ref[2:3, :], mask, float(f_true))
    h = _leaky_relu(h)
    # TODO(synk): dropout is identity here (module evaluated with training=False)
    s2 = jnp.dot(h.astype(w2_ref.dtype), w2_ref[...],
                 preferred_element_type=jnp.float32)
    s2_ref[...] = s2.astype(s2_ref.dtype)


# -- stage 2: out = log_softmax(LeakyReLU(LN(A2_tile @ S2 + b2)) @ WL + bl) ---
def _gcn_out_kernel(a_ref, s_ref, p_ref, wl_ref, bl_ref, o_ref, *,
                    f_true, fo_true):
    f_pad = p_ref.shape[-1]
    fo_pad = bl_ref.shape[-1]
    mask = _lane_mask(f_pad, f_true)
    omask = _lane_mask(fo_pad, fo_true)

    h = jnp.dot(a_ref[...], s_ref[...], preferred_element_type=jnp.float32)
    h = h + p_ref[0:1, :]
    h = _masked_layernorm(h, p_ref[1:2, :], p_ref[2:3, :], mask, float(f_true))
    h = _leaky_relu(h)

    logits = jnp.dot(h.astype(wl_ref.dtype), wl_ref[...],
                     preferred_element_type=jnp.float32) + bl_ref[...]

    # masked log_softmax over the true fan_out lanes (padded lanes excluded)
    neg = jnp.float32(-1e30)
    m = jnp.max(jnp.where(omask, logits, neg), axis=-1, keepdims=True)
    z = logits - m
    se = jnp.sum(jnp.where(omask, jnp.exp(z), 0.0), axis=-1, keepdims=True)
    o_ref[...] = z - jnp.log(se)


def _vmem_limit(nbytes):
    # 2x headroom over the estimated resident set, floored at the default
    # scoped limit, capped below v7x's 64 MiB physical VMEM.
    return int(min(max(2 * nbytes, 32 << 20), 60 << 20))


def type12_forward(x, a1, a2, params):
    """x: (N, fan_in) f32; a1/a2: (N, N) f32. Returns (N, fan_out) log-probs."""
    n, fan_in = x.shape
    fan_mid = params["w1"].shape[1]
    fan_half = params["w2"].shape[1]
    fan_out = params["wl"].shape[1]

    # lane-dense padded feature widths; sublane-friendly row tile
    fi_p = _round_up(fan_in, _LANE)
    fm_p = _round_up(fan_mid, _LANE)
    fh_p = _round_up(fan_half, _LANE)
    fo_p = _round_up(fan_out, _LANE)
    tm = _round_up(min(n, 256), 16)
    n_p = _round_up(n, tm)
    grid = (n_p // tm,)

    f32, bf16 = jnp.float32, jnp.bfloat16

    # Pad + cast HBM-side operands: bf16 at the MXU inputs, f32 accumulation
    # inside the kernels. Zero padding keeps padded rows/lanes exactly 0
    # through the whole chain (gamma/beta/bias padded with zeros).
    x_p = _pad2d(x, n_p, fi_p).astype(bf16)
    a1_p = _pad2d(a1, n_p, n_p).astype(bf16)
    a2_p = _pad2d(a2, n_p, n_p).astype(bf16)
    w1_p = _pad2d(params["w1"], fi_p, fm_p).astype(bf16)
    w2_p = _pad2d(params["w2"], fm_p, fh_p).astype(bf16)
    wl_p = _pad2d(params["wl"], fh_p, fo_p).astype(bf16)
    p1 = jnp.concatenate([_pad2d(params["b1"], 1, fm_p),
                          _pad2d(params["g1"], 1, fm_p),
                          _pad2d(params["be1"], 1, fm_p)], axis=0).astype(f32)
    p2 = jnp.concatenate([_pad2d(params["b2"], 1, fh_p),
                          _pad2d(params["g2"], 1, fh_p),
                          _pad2d(params["be2"], 1, fh_p)], axis=0).astype(f32)
    bl_p = _pad2d(params["bl"], 1, fo_p).astype(f32)

    sem = ("parallel",)   # row tiles are independent -> megacore-shardable

    # ---------------- stage 0: S1 = x @ W1 ----------------------------------
    s1 = pl.pallas_call(
        _xw_kernel,
        out_shape=jax.ShapeDtypeStruct((n_p, fm_p), bf16),
        grid=grid,
        in_specs=[pl.BlockSpec((tm, fi_p), lambda i: (i, 0)),
                  pl.BlockSpec((fi_p, fm_p), lambda i: (0, 0))],
        out_specs=pl.BlockSpec((tm, fm_p), lambda i: (i, 0)),
        compiler_params=pltpu.CompilerParams(
            dimension_semantics=sem,
            vmem_limit_bytes=_vmem_limit(
                2 * tm * fi_p * 2 + 2 * fi_p * fm_p * 2 + 2 * tm * fm_p * 2)),
        cost_estimate=pl.CostEstimate(
            flops=2 * n_p * fi_p * fm_p, transcendentals=0,
            bytes_accessed=2 * (n_p * fi_p + fi_p * fm_p + n_p * fm_p)),
    )(x_p, w1_p)

    # ------ stage 1: S2 = LeakyReLU(LN(A1 @ S1 + b1)) @ W2 (A1 row-tiled) ----
    s2 = pl.pallas_call(
        functools.partial(_gcn_mid_kernel, f_true=fan_mid),
        out_shape=jax.ShapeDtypeStruct((n_p, fh_p), bf16),
        grid=grid,
        in_specs=[pl.BlockSpec((tm, n_p), lambda i: (i, 0)),      # A1 row tile
                  pl.BlockSpec((n_p, fm_p), lambda i: (0, 0)),    # S1 (resident)
                  pl.BlockSpec((3, fm_p), lambda i: (0, 0)),      # b1/g1/be1
                  pl.BlockSpec((fm_p, fh_p), lambda i: (0, 0))],  # W2
        out_specs=pl.BlockSpec((tm, fh_p), lambda i: (i, 0)),
        compiler_params=pltpu.CompilerParams(
            dimension_semantics=sem,
            vmem_limit_bytes=_vmem_limit(
                2 * tm * n_p * 2 + 2 * n_p * fm_p * 2 + 2 * 3 * fm_p * 4
                + 2 * fm_p * fh_p * 2 + 2 * tm * fh_p * 2)),
        cost_estimate=pl.CostEstimate(
            flops=2 * n_p * n_p * fm_p + 2 * n_p * fm_p * fh_p,
            transcendentals=n_p,
            bytes_accessed=2 * (n_p * n_p + n_p * fm_p + fm_p * fh_p
                                + n_p * fh_p)),
    )(a1_p, s1, p1, w2_p)

    # -- stage 2: out = log_softmax(LeakyReLU(LN(A2 @ S2 + b2)) @ WL + bl) ----
    out_p = pl.pallas_call(
        functools.partial(_gcn_out_kernel, f_true=fan_half, fo_true=fan_out),
        out_shape=jax.ShapeDtypeStruct((n_p, fo_p), f32),
        grid=grid,
        in_specs=[pl.BlockSpec((tm, n_p), lambda i: (i, 0)),      # A2 row tile
                  pl.BlockSpec((n_p, fh_p), lambda i: (0, 0)),    # S2 (resident)
                  pl.BlockSpec((3, fh_p), lambda i: (0, 0)),      # b2/g2/be2
                  pl.BlockSpec((fh_p, fo_p), lambda i: (0, 0)),   # WL
                  pl.BlockSpec((1, fo_p), lambda i: (0, 0))],     # bl
        out_specs=pl.BlockSpec((tm, fo_p), lambda i: (i, 0)),
        compiler_params=pltpu.CompilerParams(
            dimension_semantics=sem,
            vmem_limit_bytes=_vmem_limit(
                2 * tm * n_p * 2 + 2 * n_p * fh_p * 2 + 2 * 3 * fh_p * 4
                + 2 * fh_p * fo_p * 2 + 2 * fo_p * 4 + 2 * tm * fo_p * 4)),
        cost_estimate=pl.CostEstimate(
            flops=2 * n_p * n_p * fh_p + 2 * n_p * fh_p * fo_p,
            transcendentals=n_p * (1 + fo_p),
            bytes_accessed=2 * (n_p * n_p + n_p * fh_p + fh_p * fo_p)
                           + 4 * n_p * fo_p),
    )(a2_p, s2, p2, wl_p, bl_p)

    return out_p[:n, :fan_out]


def init_params(key, fan_in, fan_mid, fan_out):
    fan_half = fan_mid // 2
    ks = jax.random.split(key, 6)
    return {
        # GraphConvolution 1: weight (fan_in, fan_mid), bias (fan_mid,)
        "w1": jax.random.normal(ks[0], (fan_in, fan_mid), jnp.float32) * 0.1,
        "b1": jax.random.normal(ks[1], (1, fan_mid), jnp.float32) * 0.01,
        "g1": jnp.ones((1, fan_mid), jnp.float32),
        "be1": jnp.zeros((1, fan_mid), jnp.float32),
        # GraphConvolution 2: weight (fan_mid, fan_mid//2), bias
        "w2": jax.random.normal(ks[2], (fan_mid, fan_half), jnp.float32) * 0.1,
        "b2": jax.random.normal(ks[3], (1, fan_half), jnp.float32) * 0.01,
        "g2": jnp.ones((1, fan_half), jnp.float32),
        "be2": jnp.zeros((1, fan_half), jnp.float32),
        # nn.Linear(fan_mid//2, fan_out), stored pre-transposed as (in, out)
        "wl": jax.random.normal(ks[4], (fan_half, fan_out), jnp.float32) * 0.1,
        "bl": jax.random.normal(ks[5], (1, fan_out), jnp.float32) * 0.01,
    }


def _reference(x, a1, a2, p):
    """Pure-JAX f32 reference of the PyTorch forward (eval mode)."""
    def ln(h, g, b):
        mu = jnp.mean(h, axis=-1, keepdims=True)
        var = jnp.mean((h - mu) ** 2, axis=-1, keepdims=True)
        return (h - mu) * jax.lax.rsqrt(var + _EPS) * g + b

    def lrelu(h):
        return jnp.where(h >= 0, h, _NEG_SLOPE * h)

    h = a1 @ (x @ p["w1"]) + p["b1"]
    h = lrelu(ln(h, p["g1"], p["be1"]))
    h = a2 @ (h @ p["w2"]) + p["b2"]
    h = lrelu(ln(h, p["g2"], p["be2"]))
    y = h @ p["wl"] + p["bl"]
    return jax.nn.log_softmax(y, axis=-1)


if __name__ == "__main__":
    # Small shapes consistent with the module.
    N, FAN_IN, FAN_MID, FAN_OUT = 16, 32, 16, 8

    key = jax.random.PRNGKey(0)
    kx, ka1, ka2, kp = jax.random.split(key, 4)

    x = jax.random.normal(kx, (N, FAN_IN), jnp.float32)

    # Symmetric, row-normalized adjacency-like matrices (one per GCN layer).
    def make_adj(k):
        a = jax.random.uniform(k, (N, N), jnp.float32)
        a = (a + a.T) * 0.5 + jnp.eye(N, dtype=jnp.float32)
        return a / jnp.sum(a, axis=-1, keepdims=True)

    a1 = make_adj(ka1)
    a2 = make_adj(ka2)

    params = init_params(kp, FAN_IN, FAN_MID, FAN_OUT)

    out = type12_forward(x, a1, a2, params)
    jax.block_until_ready(out)

    assert out.shape == (N, FAN_OUT)
    # rows of log_softmax exponentiate to ~1 (computed in f32 inside kernel)
    assert jnp.allclose(jnp.sum(jnp.exp(out), axis=-1), 1.0, atol=1e-4)
    # loose check vs f32 reference (bf16 matmul inputs, f32 accumulation)
    ref = _reference(x, a1, a2, params)
    assert float(jnp.max(jnp.abs(out - ref))) < 0.25

    print("KERNEL_OK")
</pallas_src>

<mosaic_0001>
module attributes {stable_mosaic.version = 11 : i64} {
  func.func @_xw_kernel(%arg0: i32, %arg1: memref<16x128xbf16, #tpu.memory_space<vmem>>, %arg2: memref<128x128xbf16, #tpu.memory_space<vmem>>, %arg3: memref<16x128xbf16, #tpu.memory_space<vmem>>) attributes {dimension_semantics = [#tpu.dimension_semantics<parallel>], iteration_bounds = array<i64: 1>, scalar_prefetch = 0 : i64, scratch_operands = 0 : i64, tpu.core_type = #tpu.core_type<tc>, window_params = [{transform_indices = @transform_0, window_bounds = array<i64: 16, 128>}, {pipeline_mode = #tpu.pipeline_mode<synchronous>, transform_indices = @transform_1, window_bounds = array<i64: 128, 128>}, {transform_indices = @transform_2, window_bounds = array<i64: 16, 128>}]} {
    %c0 = arith.constant 0 : index
    %c0_0 = arith.constant 0 : index
    %0 = vector.load %arg1[%c0, %c0_0] : memref<16x128xbf16, #tpu.memory_space<vmem>>, vector<16x128xbf16>
    %c0_1 = arith.constant 0 : index
    %c0_2 = arith.constant 0 : index
    %1 = vector.load %arg2[%c0_1, %c0_2] : memref<128x128xbf16, #tpu.memory_space<vmem>>, vector<128x128xbf16>
    %cst = arith.constant dense<0.000000e+00> : vector<16x128xf32>
    %2 = tpu.matmul %0, %1, %cst {dimension_numbers = #tpu.dot_dimension_numbers<[1], [0], [0], [1], [0, 0, 1, 1], [], []>} : vector<16x128xbf16>, vector<128x128xbf16>, vector<16x128xf32> -> vector<16x128xf32>
    %3 = arith.truncf %2 : vector<16x128xf32> to vector<16x128xbf16>
    %c0_3 = arith.constant 0 : index
    %c0_4 = arith.constant 0 : index
    %4 = vector.load %arg3[%c0_3, %c0_4] : memref<16x128xbf16, #tpu.memory_space<vmem>>, vector<16x128xbf16>
    tpu.vector_store %arg3[%c0_3, %c0_4], %3 {strides = array<i32>} : memref<16x128xbf16, #tpu.memory_space<vmem>>, vector<16x128xbf16>,
    return
  }
  func.func @transform_0(%arg0: i32) -> (i32, i32) {
    %c0_i32 = arith.constant 0 : i32
    %c0_i32_0 = arith.constant 0 : i32
    return %arg0, %c0_i32 : i32, i32
  }
  func.func @transform_1(%arg0: i32) -> (i32, i32) {
    %c0_i32 = arith.constant 0 : i32
    %c0_i32_0 = arith.constant 0 : i32
    %c0_i32_1 = arith.constant 0 : i32
    return %c0_i32, %c0_i32_0 : i32, i32
  }
  func.func @transform_2(%arg0: i32) -> (i32, i32) {
    %c0_i32 = arith.constant 0 : i32
    %c0_i32_0 = arith.constant 0 : i32
    return %arg0, %c0_i32 : i32, i32
  }
}

</mosaic_0001>

<llo_original>
// kernel: tpu_custom_call.1
$region0: #{tpu_custom_call.1}
  #allocation0 [shape = 'u32[]', space=smem, size = 0x4, offset = 0x4, fixed_abs, tag = 'smem constant byte address 0x4 - core index']
  #allocation1 [shape = 'u32[144,128]{1,0:T(1,128)}', space=vmem, size = 0x12000, scoped, tag = 'internal scratch']
  %s0 = inlined_call_operand.hbm [shape: bf16[16,128], index: 0, kind: input, shape index: {}]
  %s1 = inlined_call_operand.hbm [shape: bf16[128,128], index: 1, kind: input, shape index: {}]
  %s2 = inlined_call_operand.hbm [shape: bf16[16,128], index: 2, kind: output, shape index: {}]
  %s3 = sld [smem:[#allocation0]]
  $region26: #{tpu_custom_call.1} parent=0
    _
  %s5 = ssub.s32 1, %s3
  %s6 = scalar_select 0, %s5, %s3
  $region1: #{tpu_custom_call.1} parent=0
    #allocation2 [shape = 'u8[4096]{0}', space=vmem, size = 0x1000, scoped, tag = 'input window, operand 0, single buffered']
    #allocation3 [shape = 's32[1]{0}', space=sflag, size = 0x4, scoped, tag = 'scoped memory for tpu_custom_call.1']
    #allocation4 [shape = 's32[1]{0}', space=sflag, size = 0x4, scoped, tag = 'scoped memory for tpu_custom_call.1']
    #allocation5 [shape = 'u8[32768]{0}', space=vmem, size = 0x8000, scoped, tag = 'input window, operand 1, single buffered']
    #allocation6 [shape = 's32[1]{0}', space=sflag, size = 0x4, scoped, tag = 'scoped memory for tpu_custom_call.1']
    #allocation7 [shape = 'u8[4096]{0}', space=vmem, size = 0x1000, scoped, tag = 'output window, operand 0, single buffered']
    %7 = vsyncpa [#allocation3], 0
    %8 = vsyncpa [#allocation6], 0
    %9 = vsyncpa [#allocation4], 0
    // Predicated region
    $region2: #{tpu_custom_call.1} parent=1 // pred_check
      _
    $region3: #{tpu_custom_call.1} parent=1 // pred_check_branch
      %11 = sbr.rel (0) target = $region5
    $region4: #{tpu_custom_call.1} parent=1 // pred_region
      %s13 = ssub.s32 128, 128
      %14 = vsyncadd [#allocation3], %s13
      %s15 = sshll.u32 [#allocation2], 4
      %s16 = int_to_ptr.vmem [resolvable:$true] %s15
      %21 = dma.hbm_to_vmem [thread:$0]  %s0, 128, %s16, [#allocation3], 64, 64, 4
    $region5: #{tpu_custom_call.1} parent=1 // pred_fallthru
      _
    // Predicated region
    $region6: #{tpu_custom_call.1} parent=1 // pred_check
      _
    $region7: #{tpu_custom_call.1} parent=1 // pred_check_branch
      %23 = sbr.rel (0) target = $region9
    $region8: #{tpu_custom_call.1} parent=1 // pred_region
      %s25 = ssub.s32 1024, 1024
      %26 = vsyncadd [#allocation6], %s25
      %s27 = sshll.u32 [#allocation5], 4
      %s28 = int_to_ptr.vmem [resolvable:$true] %s27
      %33 = dma.hbm_to_vmem [thread:$0]  %s1, 1024, %s28, [#allocation6], 64, 64, 4
    $region9: #{tpu_custom_call.1} parent=1 // pred_fallthru
      _
    // Predicated region
    $region10: #{tpu_custom_call.1} parent=1 // pred_check
      _
    $region11: #{tpu_custom_call.1} parent=1 // pred_check_branch
      %35 = sbr.rel (0) target = $region13
    $region12: #{tpu_custom_call.1} parent=1 // pred_region
      %36 = dma.done [#allocation3], 128
    $region13: #{tpu_custom_call.1} parent=1 // pred_fallthru
      _
    // Predicated region
    $region14: #{tpu_custom_call.1} parent=1 // pred_check
      _
    $region15: #{tpu_custom_call.1} parent=1 // pred_check_branch
      %38 = sbr.rel (0) target = $region17
    $region16: #{tpu_custom_call.1} parent=1 // pred_region
      %39 = dma.done [#allocation6], 1024
    $region17: #{tpu_custom_call.1} parent=1 // pred_fallthru
      _
    %v41 = vld [vmem:[#allocation2] sm:$0xf]
    %v42 = vld [vmem:[#allocation2 + $0x4] sm:$0xf]
    %v43 = vld [vmem:[#allocation5] sm:$0xf]
    %v44 = vld [vmem:[#allocation5 + $0x4] sm:$0xf]
    %v45 = vld [vmem:[#allocation5 + $0x8] sm:$0xf]
    %v46 = vld [vmem:[#allocation5 + $0xc] sm:$0xf]
    %v47 = vld [vmem:[#allocation5 + $0x10] sm:$0xf]
    %v48 = vld [vmem:[#allocation5 + $0x14] sm:$0xf]
    %v49 = vld [vmem:[#allocation5 + $0x18] sm:$0xf]
    %v50 = vld [vmem:[#allocation5 + $0x1c] sm:$0xf]
    %v51 = vld [vmem:[#allocation5 + $0x20] sm:$0xf]
    %v52 = vld [vmem:[#allocation5 + $0x24] sm:$0xf]
    %v53 = vld [vmem:[#allocation5 + $0x28] sm:$0xf]
    %v54 = vld [vmem:[#allocation5 + $0x2c] sm:$0xf]
    %v55 = vld [vmem:[#allocation5 + $0x30] sm:$0xf]
    %v56 = vld [vmem:[#allocation5 + $0x34] sm:$0xf]
    %v57 = vld [vmem:[#allocation5 + $0x38] sm:$0xf]
    %v58 = vld [vmem:[#allocation5 + $0x3c] sm:$0xf]
    %v61 = vunpack.c.l.b16 %v41
    %v62 = vunpack.c.l.b16 %v42
    %v63 = vpack.c.b16 %v62, %v61
    %v81 = vunpack.c.l.b16 %v43
    %v82 = vunpack.c.l.b16 %v44
    %v83 = vunpack.c.l.b16 %v45
    %v84 = vunpack.c.l.b16 %v46
    %v85 = vunpack.c.l.b16 %v47
    %v86 = vunpack.c.l.b16 %v48
    %v87 = vunpack.c.l.b16 %v49
    %v88 = vunpack.c.l.b16 %v50
    %v89 = vunpack.c.l.b16 %v51
    %v90 = vunpack.c.l.b16 %v52
    %v91 = vunpack.c.l.b16 %v53
    %v92 = vunpack.c.l.b16 %v54
    %v93 = vunpack.c.l.b16 %v55
    %v94 = vunpack.c.l.b16 %v56
    %v95 = vunpack.c.l.b16 %v57
    %v96 = vunpack.c.l.b16 %v58
    %v97 = vpack.c.b16 %v82, %v81
    %v98 = vpack.c.b16 %v84, %v83
    %v99 = vpack.c.b16 %v86, %v85
    %v100 = vpack.c.b16 %v88, %v87
    %v101 = vpack.c.b16 %v90, %v89
    %v102 = vpack.c.b16 %v92, %v91
    %v103 = vpack.c.b16 %v94, %v93
    %v104 = vpack.c.b16 %v96, %v95
    %113 = vmatprep.subr.bf16.mxu0 0
    %114 = vmatpush1.bf16.msra.mxu0 %v97
    %115 = vmatprep.subr.bf16.mxu0 0
    %116 = vmatpush1.bf16.msra.mxu0 %v98
    %117 = vmatprep.subr.bf16.mxu0 0
    %118 = vmatpush1.bf16.msra.mxu0 %v99
    %119 = vmatprep.subr.bf16.mxu0 0
    %120 = vmatpush1.bf16.msra.mxu0 %v100
    %121 = vmatprep.subr.bf16.mxu0 0
    %122 = vmatpush1.bf16.msra.mxu0 %v101
    %123 = vmatprep.subr.bf16.mxu0 0
    %124 = vmatpush1.bf16.msra.mxu0 %v102
    %125 = vmatprep.subr.bf16.mxu0 0
    %126 = vmatpush1.bf16.msra.mxu0 %v103
    %127 = vmatprep.subr.bf16.mxu0 0
    %128 = vmatpush1.bf16.msra.mxu0 %v104
    %129 = vmatprep.subr.bf16.mxu0 0
    %130 = vmatpush1.bf16.msra.mxu0 0
    %131 = vmatprep.subr.bf16.mxu0 0
    %132 = vmatpush1.bf16.msra.mxu0 0
    %133 = vmatprep.subr.bf16.mxu0 0
    %134 = vmatpush1.bf16.msra.mxu0 0
    %135 = vmatprep.subr.bf16.mxu0 0
    %136 = vmatpush1.bf16.msra.mxu0 0
    %137 = vmatprep.subr.bf16.mxu0 0
    %138 = vmatpush1.bf16.msra.mxu0 0
    %139 = vmatprep.subr.bf16.mxu0 0
    %140 = vmatpush1.bf16.msra.mxu0 0
    %141 = vmatprep.subr.bf16.mxu0 0
    %142 = vmatpush1.bf16.msra.mxu0 0
    %143 = vmatprep.subr.bf16.mxu0 0
    %144 = vmatpush1.bf16.msra.mxu0 0
    %145 = vmatprep.mubr.bf16.mxu0 0
    %146 = vmatmul.mubr.bf16.gmra.mrb[0].mxu0 %v63
    %v147 = vpop.f32.mrb[0].mxu0
    %v148 = vadd.f32 0.0, %v147
    %v149 = vpop.f32.mrb[0].mxu0
    %v150 = vpop.f32.mrb[0].mxu0
    %v151 = vadd.f32 0.0, %v150
    %v152 = vpop.f32.mrb[0].mxu0
    %153 = vdwg.mxu0
    %v154 = vpack.c.bf16 %v151, %v148
    %v156 = vunpack.c.l.b16 %v154
    %v157 = vunpack.c.h.b16 %v154
    %v158 = vpack.c.b16 %v156, %v156
    %v159 = vpack.c.b16 %v157, %v157
    %162 = vst [vmem:[#allocation7] sm:$0xf] %v158
    %163 = vst [vmem:[#allocation7 + $0x4] sm:$0xf] %v159
    // Predicated region
    $region18: #{tpu_custom_call.1} parent=1 // pred_check
      _
    $region19: #{tpu_custom_call.1} parent=1 // pred_check_branch
      %165 = sbr.rel (0) target = $region21
    $region20: #{tpu_custom_call.1} parent=1 // pred_region
      %s167 = ssub.s32 128, 128
      %168 = vsyncadd [#allocation4], %s167
      %s169 = sshll.u32 [#allocation7], 4
      %s170 = int_to_ptr.vmem [resolvable:$true] %s169
      %175 = dma.vmem_to_hbm [thread:$0]  %s170, 128, %s2, [#allocation4], 64, 64, 4
    $region21: #{tpu_custom_call.1} parent=1 // pred_fallthru
      _
    // Predicated region
    $region22: #{tpu_custom_call.1} parent=1 // pred_check
      _
    $region23: #{tpu_custom_call.1} parent=1 // pred_check_branch
      %177 = sbr.rel (0) target = $region25
    $region24: #{tpu_custom_call.1} parent=1 // pred_region
      %178 = dma.done [#allocation4], 128
    $region25: #{tpu_custom_call.1} parent=1 // pred_fallthru
      _
    %179 = vsyncpa [#allocation3], 1
    %180 = vsyncpa [#allocation6], 1
    %181 = vsyncpa [#allocation4], 1

</llo_original>
